<compile_context>
chip_gen: v7x
topology: tpu7x:2x2x1
jax: 0.10.0
libtpu: 0.0.40
codegen_flags: <defaults>
</compile_context>

<pallas_src>
import math

import jax
import jax.numpy as jnp
import numpy as np
from jax.experimental import pallas as pl
from jax.experimental.pallas import tpu as pltpu


# --------------------------------------------------------------------------
# Model configuration (ModelArgs for BipedalWalker: fully continuous env)
# --------------------------------------------------------------------------
N_CONTINUOUS_ACTION = 4
N_DISCRETE_ACTION = 0
N_CONTINUOUS_STATE = 24
N_DISCRETE_STATE = 0
N_POLICY_HIDDEN = 32
N_TRANSITION_HIDDEN = 32

DISCRETE_ACTION_SECTIONS = ()   # empty for BipedalWalker
DISCRETE_STATE_SECTIONS = ()    # empty for BipedalWalker

N_STATE = N_DISCRETE_STATE + N_CONTINUOUS_STATE
N_ACTION = N_DISCRETE_ACTION + N_CONTINUOUS_ACTION

LEAKY_SLOPE = 0.01              # nn.LeakyReLU default
PAD = 128                       # lane-dense feature padding
_LOG_2PI = math.log(2.0 * math.pi)

# Batch-tiled grid is enabled only when it pays off.
_GRID_BATCH_THRESHOLD = 256
_BATCH_TILE = 256


# --------------------------------------------------------------------------
# In-kernel helpers (operate on loaded values / packed-param refs)
# --------------------------------------------------------------------------
def _dot(a, b):
    return jnp.dot(a, b, preferred_element_type=jnp.float32)


def _leaky(h):
    # maximum form keeps it a single VPU op chain (no hidden casts on v5e).
    return jnp.maximum(h, LEAKY_SLOPE * h)


def _custom_softmax(y, discrete_dim, sections):
    """CustomSoftMax head on a 128-lane-padded y."""
    if discrete_dim == 0:
        return jnp.tanh(y)   # padded lanes: tanh(0) = 0
    # TODO(synk): dead code for BipedalWalker (no discrete dims).  A discrete
    # env should replace this per-section slice loop with one masked
    # segment-softmax (broadcasted_iota section ids) to avoid sub-128-lane
    # relayouts.
    parts = []
    off = 0
    for s in sections:
        logits = y[:, off:off + s]
        m = jnp.max(logits, axis=-1, keepdims=True)
        e = jnp.exp(logits - m)
        parts.append(e / jnp.sum(e, axis=-1, keepdims=True))
        off += s
    parts.append(jnp.tanh(y[:, discrete_dim:]))
    return jnp.concatenate(parts, axis=-1)


def _policy_mlp(x, w_ref, b_ref):
    """policy_net: 4x Linear + LeakyReLU + CustomSoftMax (packed rows 0..3)."""
    h = _leaky(_dot(x, w_ref[0]) + b_ref[0:1, :])
    h = _leaky(_dot(h, w_ref[1]) + b_ref[1:2, :])
    h = _leaky(_dot(h, w_ref[2]) + b_ref[2:3, :])
    y = _dot(h, w_ref[3]) + b_ref[3:4, :]
    return _custom_softmax(y, N_DISCRETE_ACTION, DISCRETE_ACTION_SECTIONS)


def _transition_mlp(state, action, w_ref, b_ref):
    """transition_net with the first layer split (state rows / action rows),
    so cat(state, action) is never materialized."""
    h = _leaky(_dot(state, w_ref[4]) + _dot(action, w_ref[5]) + b_ref[4:5, :])
    h = _leaky(_dot(h, w_ref[6]) + b_ref[5:6, :])
    h = _leaky(_dot(h, w_ref[7]) + b_ref[6:7, :])
    y = _dot(h, w_ref[8]) + b_ref[7:8, :]
    return _custom_softmax(y, N_DISCRETE_STATE, DISCRETE_STATE_SECTIONS)


def _gauss_logprob(x, mean, log_std_row, n_dims):
    # MultivariateNormal(mean, diag_embed(exp(log_std))): variance = exp(log_std).
    # Padded lanes contribute exactly 0 (diff=0, log_std=0); n_dims is the real dim.
    diff = x - mean
    quad = jnp.sum(diff * diff * jnp.exp(-log_std_row), axis=-1, keepdims=True)
    log_det = jnp.sum(log_std_row, axis=-1, keepdims=True)
    return -0.5 * (quad + n_dims * _LOG_2PI + log_det)


# --------------------------------------------------------------------------
# Pallas kernels
# --------------------------------------------------------------------------
def _policy_forward_kernel(x_ref, w_ref, b_ref, out_ref):
    out_ref[...] = _policy_mlp(x_ref[...], w_ref, b_ref)


def _transition_forward_kernel(s_ref, a_ref, w_ref, b_ref, out_ref):
    out_ref[...] = _transition_mlp(s_ref[...], a_ref[...], w_ref, b_ref)


def _policy_logprob_kernel(s_ref, a_ref, w_ref, b_ref, out_ref):
    mean = _policy_mlp(s_ref[...], w_ref, b_ref)
    lp = _gauss_logprob(a_ref[...], mean, b_ref[8:9, :], N_CONTINUOUS_ACTION)
    out_ref[...] = jnp.broadcast_to(lp, out_ref.shape)


def _policy_action_kernel(s_ref, na_ref, w_ref, b_ref, out_ref):
    mean = _policy_mlp(s_ref[...], w_ref, b_ref)
    log_std = b_ref[8:9, :]
    action = mean + jnp.exp(0.5 * log_std) * na_ref[...]
    lp = _gauss_logprob(action, mean, log_std, N_CONTINUOUS_ACTION)
    b = out_ref.shape[0]
    out_ref[...] = jnp.concatenate(
        [action, jnp.broadcast_to(lp, (b, PAD))], axis=-1)


def _step_kernel(s_ref, na_ref, ns_ref, w_ref, b_ref, out_ref):
    """Fused Policy.step: policy MLP + sample + transition MLP + sample + log-probs."""
    state = s_ref[...]
    # policy_net branch
    mean_a = _policy_mlp(state, w_ref, b_ref)
    log_std_a = b_ref[8:9, :]
    action = mean_a + jnp.exp(0.5 * log_std_a) * na_ref[...]
    lp_a = _gauss_logprob(action, mean_a, log_std_a, N_CONTINUOUS_ACTION)
    # transition_net branch (split first layer -> no concat needed)
    mean_s = _transition_mlp(state, action, w_ref, b_ref)
    log_std_s = b_ref[9:10, :]
    next_state = mean_s + jnp.exp(0.5 * log_std_s) * ns_ref[...]
    lp_s = _gauss_logprob(next_state, mean_s, log_std_s, N_CONTINUOUS_STATE)
    b = out_ref.shape[0]
    lp = jnp.broadcast_to(lp_a + lp_s, (b, PAD))
    # single lane-dense 384-wide store: [action | next_state | log_prob]
    out_ref[...] = jnp.concatenate([action, next_state, lp], axis=-1)


# --------------------------------------------------------------------------
# pallas_call wrapper (grid=() for tiny batches, batch-tiled grid otherwise)
# --------------------------------------------------------------------------
def _run_mlp_kernel(kernel, acts, params, out_width, n_mats):
    w_pack, b_pack = params["w_pack"], params["b_pack"]
    batch = acts[0].shape[0]
    cost = pl.CostEstimate(
        flops=int(2 * batch * n_mats * PAD * PAD),
        transcendentals=int(8 * batch * PAD),
        bytes_accessed=int(4 * (batch * PAD * len(acts) + batch * out_width
                                + w_pack.size + b_pack.size)))
    out_shape = jax.ShapeDtypeStruct((batch, out_width), jnp.float32)
    vmem = pltpu.MemorySpace.VMEM

    if batch >= _GRID_BATCH_THRESHOLD and batch % _BATCH_TILE == 0:
        tb = _BATCH_TILE
        call = pl.pallas_call(
            kernel,
            out_shape=out_shape,
            grid=(batch // tb,),
            in_specs=([pl.BlockSpec((tb, PAD), lambda i: (i, 0)) for _ in acts]
                      + [pl.BlockSpec(w_pack.shape, lambda i: (0, 0, 0)),
                         pl.BlockSpec(b_pack.shape, lambda i: (0, 0))]),
            out_specs=pl.BlockSpec((tb, out_width), lambda i: (i, 0)),
            compiler_params=pltpu.CompilerParams(
                dimension_semantics=("parallel",)),
            cost_estimate=cost,
        )
    else:
        call = pl.pallas_call(
            kernel,
            out_shape=out_shape,
            in_specs=[pl.BlockSpec(memory_space=vmem)] * (len(acts) + 2),
            out_specs=pl.BlockSpec(memory_space=vmem),
            cost_estimate=cost,
        )
    return call(*acts, w_pack, b_pack)


def _pad_cols(x, width=PAD):
    return jnp.pad(x, ((0, 0), (0, width - x.shape[-1])))


# --------------------------------------------------------------------------
# Parameter construction (deterministic synthetic init, mirrors __init__ shapes)
# --------------------------------------------------------------------------
def _init_linear(key, fan_in, fan_out, w_scale=0.1, b_scale=0.05):
    kw, kb = jax.random.split(key)
    w = w_scale * jax.random.normal(kw, (fan_in, fan_out), dtype=jnp.float32)
    b = b_scale * jax.random.normal(kb, (fan_out,), dtype=jnp.float32)
    return w, b


def _pad_mat(w):
    r, c = w.shape
    return jnp.pad(w, ((0, PAD - r), (0, PAD - c)))


def _pad_vec(v):
    return jnp.pad(v, (0, PAD - v.shape[0]))


def make_policy_params(key, action_log_std=0.0, state_log_std=0.0):
    keys = jax.random.split(key, 8)
    policy = [
        _init_linear(keys[0], N_STATE, N_POLICY_HIDDEN),
        _init_linear(keys[1], N_POLICY_HIDDEN, N_POLICY_HIDDEN),
        _init_linear(keys[2], N_POLICY_HIDDEN, N_POLICY_HIDDEN),
        _init_linear(keys[3], N_POLICY_HIDDEN, N_ACTION),
    ]
    transition = [
        _init_linear(keys[4], N_STATE + N_ACTION, N_TRANSITION_HIDDEN),
        _init_linear(keys[5], N_TRANSITION_HIDDEN, N_TRANSITION_HIDDEN),
        _init_linear(keys[6], N_TRANSITION_HIDDEN, N_TRANSITION_HIDDEN),
        _init_linear(keys[7], N_TRANSITION_HIDDEN, N_STATE),
    ]
    # nn.Parameter(torch.ones(1, n) * log_std)
    a_log_std = jnp.full((N_CONTINUOUS_ACTION,), action_log_std, jnp.float32)
    s_log_std = jnp.full((N_CONTINUOUS_STATE,), state_log_std, jnp.float32)

    tw1, tb1 = transition[0]
    # packed weights: rows 0-3 policy W1..W4, 4 tw1[state], 5 tw1[action], 6-8 tw2..tw4
    w_pack = jnp.stack([
        _pad_mat(policy[0][0]), _pad_mat(policy[1][0]),
        _pad_mat(policy[2][0]), _pad_mat(policy[3][0]),
        _pad_mat(tw1[:N_STATE, :]), _pad_mat(tw1[N_STATE:, :]),
        _pad_mat(transition[1][0]), _pad_mat(transition[2][0]),
        _pad_mat(transition[3][0]),
    ])
    # packed biases/log-stds: rows 0-3 policy b, 4-7 transition b, 8/9 log-stds
    b_pack = jnp.stack([
        _pad_vec(policy[0][1]), _pad_vec(policy[1][1]),
        _pad_vec(policy[2][1]), _pad_vec(policy[3][1]),
        _pad_vec(tb1), _pad_vec(transition[1][1]),
        _pad_vec(transition[2][1]), _pad_vec(transition[3][1]),
        _pad_vec(a_log_std), _pad_vec(s_log_std),
    ])
    return {
        "w_pack": w_pack,
        "b_pack": b_pack,
        "raw": {"policy": policy, "transition": transition,
                "action_log_std": a_log_std, "state_log_std": s_log_std},
    }


# --------------------------------------------------------------------------
# Policy methods (thin wrappers around the fused kernels)
# --------------------------------------------------------------------------
def policy_net_forward(params, state):
    out = _run_mlp_kernel(_policy_forward_kernel, [_pad_cols(state)],
                          params, PAD, 4)
    return out[:, :N_ACTION]


def transition_net_forward(params, state, action):
    # equivalent to transition_net(cat(state, action)); no concat materialized.
    out = _run_mlp_kernel(_transition_forward_kernel,
                          [_pad_cols(state), _pad_cols(action)], params, PAD, 5)
    return out[:, :N_STATE]


def get_policy_net_log_prob(params, state, continuous_action):
    out = _run_mlp_kernel(_policy_logprob_kernel,
                          [_pad_cols(state), _pad_cols(continuous_action)],
                          params, PAD, 4)
    return out[:, :1]


def get_policy_net_action(params, state, key):
    # TODO(synk): torch.distributions RNG has no Pallas equivalent; N(0,1) noise
    # is drawn with jax.random here and consumed inside the fused kernel.
    batch = state.shape[0]
    noise = jax.random.normal(key, (batch, N_CONTINUOUS_ACTION), jnp.float32)
    out = _run_mlp_kernel(_policy_action_kernel,
                          [_pad_cols(state), _pad_cols(noise)],
                          params, 2 * PAD, 4)
    return out[:, :N_CONTINUOUS_ACTION], out[:, PAD:PAD + 1]


def _policy_step_from_noise(params, state, noise_action, noise_state):
    out = _run_mlp_kernel(
        _step_kernel,
        [_pad_cols(state), _pad_cols(noise_action), _pad_cols(noise_state)],
        params, 3 * PAD, 9)
    action = out[:, :N_CONTINUOUS_ACTION]
    next_state = out[:, PAD:PAD + N_CONTINUOUS_STATE]
    log_prob = out[:, 2 * PAD:2 * PAD + 1]
    return action, next_state, log_prob


def policy_step(params, state, key):
    """Policy.step (continuous env): sampled action, sampled next_state,
    policy_log_prob + transition_log_prob — all in ONE pallas_call."""
    batch = state.shape[0]
    ka, ks = jax.random.split(key)
    noise_a = jax.random.normal(ka, (batch, N_CONTINUOUS_ACTION), jnp.float32)
    noise_s = jax.random.normal(ks, (batch, N_CONTINUOUS_STATE), jnp.float32)
    return _policy_step_from_noise(params, state, noise_a, noise_s)


# --------------------------------------------------------------------------
# Pure-JAX reference (for correctness checks)
# --------------------------------------------------------------------------
def _ref_net(x, layers):
    (w1, b1), (w2, b2), (w3, b3), (w4, b4) = layers
    h = x @ w1 + b1
    h = jnp.maximum(h, LEAKY_SLOPE * h)
    h = h @ w2 + b2
    h = jnp.maximum(h, LEAKY_SLOPE * h)
    h = h @ w3 + b3
    h = jnp.maximum(h, LEAKY_SLOPE * h)
    return jnp.tanh(h @ w4 + b4)


def _ref_logprob(x, mean, log_std):
    quad = jnp.sum((x - mean) ** 2 * jnp.exp(-log_std), axis=-1)
    return -0.5 * (quad + log_std.shape[-1] * _LOG_2PI + jnp.sum(log_std))


def _ref_step(raw, state, noise_a, noise_s):
    mean_a = _ref_net(state, raw["policy"])
    action = mean_a + jnp.exp(0.5 * raw["action_log_std"]) * noise_a
    lp_a = _ref_logprob(action, mean_a, raw["action_log_std"])
    mean_s = _ref_net(jnp.concatenate([state, action], axis=-1), raw["transition"])
    next_state = mean_s + jnp.exp(0.5 * raw["state_log_std"]) * noise_s
    lp_s = _ref_logprob(next_state, mean_s, raw["state_log_std"])
    return action, next_state, (lp_a + lp_s)[:, None]


# --------------------------------------------------------------------------
# Main
# --------------------------------------------------------------------------
if __name__ == "__main__":
    key = jax.random.PRNGKey(0)
    k_params, k_state, k_action, k_na, k_ns, k_big = jax.random.split(key, 6)
    params = make_policy_params(k_params)
    raw = params["raw"]

    batch = 8
    state = jax.random.normal(k_state, (batch, N_STATE), jnp.float32)
    action_in = jax.random.normal(k_action, (batch, N_ACTION), jnp.float32)
    noise_a = jax.random.normal(k_na, (batch, N_CONTINUOUS_ACTION), jnp.float32)
    noise_s = jax.random.normal(k_ns, (batch, N_CONTINUOUS_STATE), jnp.float32)

    # --- Pallas kernels (small batch, grid=()) ---
    pol_out = policy_net_forward(params, state)
    trans_out = transition_net_forward(params, state, action_in)
    lp_given = get_policy_net_log_prob(params, state, action_in)
    k_sample = jax.random.PRNGKey(7)
    act_sampled, lp_sampled = get_policy_net_action(params, state, k_sample)
    act, nxt, lp_step = _policy_step_from_noise(params, state, noise_a, noise_s)

    # --- Pallas fused step (large batch, batch-tiled parallel grid) ---
    big_batch = 512
    kb1, kb2, kb3 = jax.random.split(k_big, 3)
    big_state = jax.random.normal(kb1, (big_batch, N_STATE), jnp.float32)
    big_na = jax.random.normal(kb2, (big_batch, N_CONTINUOUS_ACTION), jnp.float32)
    big_ns = jax.random.normal(kb3, (big_batch, N_CONTINUOUS_STATE), jnp.float32)
    big_act, big_nxt, big_lp = _policy_step_from_noise(params, big_state, big_na, big_ns)

    jax.block_until_ready((pol_out, trans_out, lp_given, act_sampled, lp_sampled,
                           act, nxt, lp_step, big_act, big_nxt, big_lp))

    # --- references ---
    ref_pol = _ref_net(state, raw["policy"])
    ref_trans = _ref_net(jnp.concatenate([state, action_in], axis=-1),
                         raw["transition"])
    ref_lp_given = _ref_logprob(action_in, ref_pol, raw["action_log_std"])[:, None]
    noise7 = jax.random.normal(k_sample, (batch, N_CONTINUOUS_ACTION), jnp.float32)
    ref_act_sampled = ref_pol + jnp.exp(0.5 * raw["action_log_std"]) * noise7
    ref_lp_sampled = _ref_logprob(ref_act_sampled, ref_pol,
                                  raw["action_log_std"])[:, None]
    ref_act, ref_nxt, ref_lp_step = _ref_step(raw, state, noise_a, noise_s)
    ref_big_act, ref_big_nxt, ref_big_lp = _ref_step(raw, big_state, big_na, big_ns)

    tol = dict(atol=2e-2, rtol=2e-2)
    np.testing.assert_allclose(np.asarray(pol_out), np.asarray(ref_pol), **tol)
    np.testing.assert_allclose(np.asarray(trans_out), np.asarray(ref_trans), **tol)
    np.testing.assert_allclose(np.asarray(lp_given), np.asarray(ref_lp_given), **tol)
    np.testing.assert_allclose(np.asarray(act_sampled), np.asarray(ref_act_sampled), **tol)
    np.testing.assert_allclose(np.asarray(lp_sampled), np.asarray(ref_lp_sampled), **tol)
    np.testing.assert_allclose(np.asarray(act), np.asarray(ref_act), **tol)
    np.testing.assert_allclose(np.asarray(nxt), np.asarray(ref_nxt), **tol)
    np.testing.assert_allclose(np.asarray(lp_step), np.asarray(ref_lp_step), **tol)
    np.testing.assert_allclose(np.asarray(big_act), np.asarray(ref_big_act), **tol)
    np.testing.assert_allclose(np.asarray(big_nxt), np.asarray(ref_big_nxt), **tol)
    np.testing.assert_allclose(np.asarray(big_lp), np.asarray(ref_big_lp), **tol)

    assert pol_out.shape == (batch, N_ACTION)
    assert trans_out.shape == (batch, N_STATE)
    assert lp_given.shape == (batch, 1)
    assert act.shape == (batch, N_ACTION) and nxt.shape == (batch, N_STATE)
    assert lp_step.shape == (batch, 1)
    assert big_act.shape == (big_batch, N_ACTION)
    assert bool(jnp.all(jnp.abs(pol_out) <= 1.0))    # tanh head
    assert bool(jnp.all(jnp.abs(trans_out) <= 1.0))  # tanh head

    print("KERNEL_OK")
</pallas_src>

<mosaic_0001>
module attributes {stable_mosaic.version = 11 : i64} {
  func.func @_policy_forward_kernel(%arg0: memref<8x128xf32, #tpu.memory_space<vmem>>, %arg1: memref<9x128x128xf32, #tpu.memory_space<vmem>>, %arg2: memref<10x128xf32, #tpu.memory_space<vmem>>, %arg3: memref<8x128xf32, #tpu.memory_space<vmem>>) attributes {dimension_semantics = [], scalar_prefetch = 0 : i64, scratch_operands = 0 : i64, tpu.core_type = #tpu.core_type<tc>} {
    %c0 = arith.constant 0 : index
    %c0_0 = arith.constant 0 : index
    %0 = vector.load %arg0[%c0, %c0_0] : memref<8x128xf32, #tpu.memory_space<vmem>>, vector<8x128xf32>
    %c0_1 = arith.constant 0 : index
    %c0_2 = arith.constant 0 : index
    %c0_3 = arith.constant 0 : index
    %1 = vector.load %arg1[%c0_1, %c0_2, %c0_3] : memref<9x128x128xf32, #tpu.memory_space<vmem>>, vector<1x128x128xf32>
    %2 = vector.shape_cast %1 : vector<1x128x128xf32> to vector<128x128xf32>
    %cst = arith.constant dense<0.000000e+00> : vector<8x128xf32>
    %3 = tpu.matmul %0, %2, %cst {dimension_numbers = #tpu.dot_dimension_numbers<[1], [0], [0], [1], [0, 0, 1, 1], [], []>} : vector<8x128xf32>, vector<128x128xf32>, vector<8x128xf32> -> vector<8x128xf32>
    %c0_4 = arith.constant 0 : index
    %c0_5 = arith.constant 0 : index
    %4 = vector.load %arg2[%c0_4, %c0_5] : memref<10x128xf32, #tpu.memory_space<vmem>>, vector<1x128xf32>
    %5 = vector.broadcast %4 : vector<1x128xf32> to vector<8x128xf32>
    %6 = arith.addf %3, %5 : vector<8x128xf32>
    %cst_6 = arith.constant 0.00999999977 : f32
    %7 = vector.broadcast %cst_6 : f32 to vector<8x128xf32>
    %8 = arith.mulf %7, %6 : vector<8x128xf32>
    %9 = arith.maximumf %6, %8 : vector<8x128xf32>
    %c1 = arith.constant 1 : index
    %c0_7 = arith.constant 0 : index
    %c0_8 = arith.constant 0 : index
    %10 = vector.load %arg1[%c1, %c0_7, %c0_8] : memref<9x128x128xf32, #tpu.memory_space<vmem>>, vector<1x128x128xf32>
    %11 = vector.shape_cast %10 : vector<1x128x128xf32> to vector<128x128xf32>
    %cst_9 = arith.constant dense<0.000000e+00> : vector<8x128xf32>
    %12 = tpu.matmul %9, %11, %cst_9 {dimension_numbers = #tpu.dot_dimension_numbers<[1], [0], [0], [1], [0, 0, 1, 1], [], []>} : vector<8x128xf32>, vector<128x128xf32>, vector<8x128xf32> -> vector<8x128xf32>
    %c1_10 = arith.constant 1 : index
    %c0_11 = arith.constant 0 : index
    %13 = vector.load %arg2[%c1_10, %c0_11] : memref<10x128xf32, #tpu.memory_space<vmem>>, vector<1x128xf32>
    %14 = vector.broadcast %13 : vector<1x128xf32> to vector<8x128xf32>
    %15 = arith.addf %12, %14 : vector<8x128xf32>
    %cst_12 = arith.constant 0.00999999977 : f32
    %16 = vector.broadcast %cst_12 : f32 to vector<8x128xf32>
    %17 = arith.mulf %16, %15 : vector<8x128xf32>
    %18 = arith.maximumf %15, %17 : vector<8x128xf32>
    %c2 = arith.constant 2 : index
    %c0_13 = arith.constant 0 : index
    %c0_14 = arith.constant 0 : index
    %19 = vector.load %arg1[%c2, %c0_13, %c0_14] : memref<9x128x128xf32, #tpu.memory_space<vmem>>, vector<1x128x128xf32>
    %20 = vector.shape_cast %19 : vector<1x128x128xf32> to vector<128x128xf32>
    %cst_15 = arith.constant dense<0.000000e+00> : vector<8x128xf32>
    %21 = tpu.matmul %18, %20, %cst_15 {dimension_numbers = #tpu.dot_dimension_numbers<[1], [0], [0], [1], [0, 0, 1, 1], [], []>} : vector<8x128xf32>, vector<128x128xf32>, vector<8x128xf32> -> vector<8x128xf32>
    %c2_16 = arith.constant 2 : index
    %c0_17 = arith.constant 0 : index
    %22 = vector.load %arg2[%c2_16, %c0_17] : memref<10x128xf32, #tpu.memory_space<vmem>>, vector<1x128xf32>
    %23 = vector.broadcast %22 : vector<1x128xf32> to vector<8x128xf32>
    %24 = arith.addf %21, %23 : vector<8x128xf32>
    %cst_18 = arith.constant 0.00999999977 : f32
    %25 = vector.broadcast %cst_18 : f32 to vector<8x128xf32>
    %26 = arith.mulf %25, %24 : vector<8x128xf32>
    %27 = arith.maximumf %24, %26 : vector<8x128xf32>
    %c3 = arith.constant 3 : index
    %c0_19 = arith.constant 0 : index
    %c0_20 = arith.constant 0 : index
    %28 = vector.load %arg1[%c3, %c0_19, %c0_20] : memref<9x128x128xf32, #tpu.memory_space<vmem>>, vector<1x128x128xf32>
    %29 = vector.shape_cast %28 : vector<1x128x128xf32> to vector<128x128xf32>
    %cst_21 = arith.constant dense<0.000000e+00> : vector<8x128xf32>
    %30 = tpu.matmul %27, %29, %cst_21 {dimension_numbers = #tpu.dot_dimension_numbers<[1], [0], [0], [1], [0, 0, 1, 1], [], []>} : vector<8x128xf32>, vector<128x128xf32>, vector<8x128xf32> -> vector<8x128xf32>
    %c3_22 = arith.constant 3 : index
    %c0_23 = arith.constant 0 : index
    %31 = vector.load %arg2[%c3_22, %c0_23] : memref<10x128xf32, #tpu.memory_space<vmem>>, vector<1x128xf32>
    %32 = vector.broadcast %31 : vector<1x128xf32> to vector<8x128xf32>
    %33 = arith.addf %30, %32 : vector<8x128xf32>
    %34 = math.tanh %33 : vector<8x128xf32>
    %c0_24 = arith.constant 0 : index
    %c0_25 = arith.constant 0 : index
    %35 = vector.load %arg3[%c0_24, %c0_25] : memref<8x128xf32, #tpu.memory_space<vmem>>, vector<8x128xf32>
    tpu.vector_store %arg3[%c0_24, %c0_25], %34 {strides = array<i32>} : memref<8x128xf32, #tpu.memory_space<vmem>>, vector<8x128xf32>,
    return
  }
}

</mosaic_0001>

<llo_original>
// kernel: tpu_custom_call.1
$region0: #{tpu_custom_call.1}
  #allocation0 [shape = 'u32[]', space=smem, size = 0x4, offset = 0x4, fixed_abs, tag = 'smem constant byte address 0x4 - core index']
  #allocation1 [shape = 'u32[144,128]{1,0:T(1,128)}', space=vmem, size = 0x12000, scoped, tag = 'internal scratch']
  %s0 = inlined_call_operand.hbm [shape: f32[8,128], index: 0, kind: input, shape index: {}]
  %s1 = inlined_call_operand.hbm [shape: f32[9,128,128], index: 1, kind: input, shape index: {}]
  %s2 = inlined_call_operand.hbm [shape: f32[10,128], index: 2, kind: input, shape index: {}]
  %s3 = inlined_call_operand.hbm [shape: f32[8,128], index: 3, kind: output, shape index: {}]
  %s4 = sld [smem:[#allocation0]]
  $region34: #{tpu_custom_call.1} parent=0
    _
  %s6 = ssub.s32 1, %s4
  %s7 = scalar_select 0, %s6, %s4
  $region1: #{tpu_custom_call.1} parent=0
    #allocation2 [shape = 'u8[4096]{0}', space=vmem, size = 0x1000, scoped, tag = 'input window, operand 0, single buffered']
    #allocation3 [shape = 's32[1]{0}', space=sflag, size = 0x4, scoped, tag = 'scoped memory for tpu_custom_call.1']
    #allocation4 [shape = 's32[1]{0}', space=sflag, size = 0x4, scoped, tag = 'scoped memory for tpu_custom_call.1']
    #allocation5 [shape = 'u8[589824]{0}', space=vmem, size = 0x90000, scoped, tag = 'input window, operand 1, single buffered']
    #allocation6 [shape = 's32[1]{0}', space=sflag, size = 0x4, scoped, tag = 'scoped memory for tpu_custom_call.1']
    #allocation7 [shape = 'u8[8192]{0}', space=vmem, size = 0x2000, scoped, tag = 'input window, operand 2, single buffered']
    #allocation8 [shape = 'u8[4096]{0}', space=vmem, size = 0x1000, scoped, tag = 'output window, operand 0, single buffered']
    %8 = vsyncpa [#allocation3], 0
    %9 = vsyncpa [#allocation6], 0
    %10 = vsyncpa [#allocation4], 0
    // Predicated region
    $region2: #{tpu_custom_call.1} parent=1 // pred_check
      _
    $region3: #{tpu_custom_call.1} parent=1 // pred_check_branch
      %12 = sbr.rel (0) target = $region5
    $region4: #{tpu_custom_call.1} parent=1 // pred_region
      %s14 = ssub.s32 128, 128
      %15 = vsyncadd [#allocation3], %s14
      %s17 = sshll.u32 [#allocation2], 4
      %s18 = int_to_ptr.vmem [resolvable:$true] %s17
      %20 = dma.hbm_to_vmem [thread:$0]  %s0, 128, %s18, [#allocation3]
    $region5: #{tpu_custom_call.1} parent=1 // pred_fallthru
      _
    // Predicated region
    $region6: #{tpu_custom_call.1} parent=1 // pred_check
      _
    $region7: #{tpu_custom_call.1} parent=1 // pred_check_branch
      %22 = sbr.rel (0) target = $region9
    $region8: #{tpu_custom_call.1} parent=1 // pred_region
      %s24 = ssub.s32 18432, 18432
      %25 = vsyncadd [#allocation6], %s24
      %s26 = sshll.u32 [#allocation5], 4
      %s27 = int_to_ptr.vmem [resolvable:$true] %s26
      %32 = dma.hbm_to_vmem [thread:$0]  %s1, 18432, %s27, [#allocation6], 128, 128, 8
    $region9: #{tpu_custom_call.1} parent=1 // pred_fallthru
      _
    // Predicated region
    $region10: #{tpu_custom_call.1} parent=1 // pred_check
      _
    $region11: #{tpu_custom_call.1} parent=1 // pred_check_branch
      %34 = sbr.rel (0) target = $region13
    $region12: #{tpu_custom_call.1} parent=1 // pred_region
      %s36 = ssub.s32 256, 256
      %37 = vsyncadd [#allocation6], %s36
      %s38 = sshll.u32 [#allocation7], 4
      %s39 = int_to_ptr.vmem [resolvable:$true] %s38
      %44 = dma.hbm_to_vmem [thread:$0]  %s2, 256, %s39, [#allocation6], 128, 128, 8
    $region13: #{tpu_custom_call.1} parent=1 // pred_fallthru
      _
    // Predicated region
    $region14: #{tpu_custom_call.1} parent=1 // pred_check
      _
    $region15: #{tpu_custom_call.1} parent=1 // pred_check_branch
      %46 = sbr.rel (0) target = $region17
    $region16: #{tpu_custom_call.1} parent=1 // pred_region
      %47 = dma.done [#allocation3], 128
    $region17: #{tpu_custom_call.1} parent=1 // pred_fallthru
      _
    // Predicated region
    $region18: #{tpu_custom_call.1} parent=1 // pred_check
      _
    $region19: #{tpu_custom_call.1} parent=1 // pred_check_branch
      %49 = sbr.rel (0) target = $region21
    $region20: #{tpu_custom_call.1} parent=1 // pred_region
      %50 = dma.done [#allocation6], 18432
    $region21: #{tpu_custom_call.1} parent=1 // pred_fallthru
      _
    // Predicated region
    $region22: #{tpu_custom_call.1} parent=1 // pred_check
      _
    $region23: #{tpu_custom_call.1} parent=1 // pred_check_branch
      %52 = sbr.rel (0) target = $region25
    $region24: #{tpu_custom_call.1} parent=1 // pred_region
      %53 = dma.done [#allocation6], 256
    $region25: #{tpu_custom_call.1} parent=1 // pred_fallthru
      _
    %v54 = vld [vmem:[#allocation2] sm:$0xff]
    %v55 = vld [vmem:[#allocation5] sm:$0xff]
    %v56 = vld [vmem:[#allocation5 + $0x8] sm:$0xff]
    %v57 = vld [vmem:[#allocation5 + $0x10] sm:$0xff]
    %v58 = vld [vmem:[#allocation5 + $0x18] sm:$0xff]
    %v59 = vld [vmem:[#allocation5 + $0x20] sm:$0xff]
    %v60 = vld [vmem:[#allocation5 + $0x28] sm:$0xff]
    %v61 = vld [vmem:[#allocation5 + $0x30] sm:$0xff]
    %v62 = vld [vmem:[#allocation5 + $0x38] sm:$0xff]
    %v63 = vld [vmem:[#allocation5 + $0x40] sm:$0xff]
    %v64 = vld [vmem:[#allocation5 + $0x48] sm:$0xff]
    %v65 = vld [vmem:[#allocation5 + $0x50] sm:$0xff]
    %v66 = vld [vmem:[#allocation5 + $0x58] sm:$0xff]
    %v67 = vld [vmem:[#allocation5 + $0x60] sm:$0xff]
    %v68 = vld [vmem:[#allocation5 + $0x68] sm:$0xff]
    %v69 = vld [vmem:[#allocation5 + $0x70] sm:$0xff]
    %v70 = vld [vmem:[#allocation5 + $0x78] sm:$0xff]
    %v71 = vld [vmem:[#allocation7] sm:$0x1]
    %v72 = vlaneseq
    %v73 = vshrl.u32 %v72, 7
    %v74 = vsub.s32 0, %v73
    %v75 = vrot.slane %v71, %v74
    %76 = vmatprep.subr.mxu0 0.0
    %77 = vmatpush1.msra.mxu0 %v55
    %78 = vmatprep.subr.mxu0 0.0
    %79 = vmatpush1.msra.mxu0 %v56
    %80 = vmatprep.subr.mxu0 0.0
    %81 = vmatpush1.msra.mxu0 %v57
    %82 = vmatprep.subr.mxu0 0.0
    %83 = vmatpush1.msra.mxu0 %v58
    %84 = vmatprep.subr.mxu0 0.0
    %85 = vmatpush1.msra.mxu0 %v59
    %86 = vmatprep.subr.mxu0 0.0
    %87 = vmatpush1.msra.mxu0 %v60
    %88 = vmatprep.subr.mxu0 0.0
    %89 = vmatpush1.msra.mxu0 %v61
    %90 = vmatprep.subr.mxu0 0.0
    %91 = vmatpush1.msra.mxu0 %v62
    %92 = vmatprep.subr.mxu0 0.0
    %93 = vmatpush1.msra.mxu0 %v63
    %94 = vmatprep.subr.mxu0 0.0
    %95 = vmatpush1.msra.mxu0 %v64
    %96 = vmatprep.subr.mxu0 0.0
    %97 = vmatpush1.msra.mxu0 %v65
    %98 = vmatprep.subr.mxu0 0.0
    %99 = vmatpush1.msra.mxu0 %v66
    %100 = vmatprep.subr.mxu0 0.0
    %101 = vmatpush1.msra.mxu0 %v67
    %102 = vmatprep.subr.mxu0 0.0
    %103 = vmatpush1.msra.mxu0 %v68
    %104 = vmatprep.subr.mxu0 0.0
    %105 = vmatpush1.msra.mxu0 %v69
    %106 = vmatprep.subr.mxu0 0.0
    %107 = vmatpush1.msra.mxu0 %v70
    %108 = vmatprep.subr.mxu0 0.0
    %109 = vmatpush1.msra.mxu0 0.0
    %110 = vmatprep.subr.mxu0 0.0
    %111 = vmatpush1.msra.mxu0 0.0
    %112 = vmatprep.subr.mxu0 0.0
    %113 = vmatpush1.msra.mxu0 0.0
    %114 = vmatprep.subr.mxu0 0.0
    %115 = vmatpush1.msra.mxu0 0.0
    %116 = vmatprep.subr.mxu0 0.0
    %117 = vmatpush1.msra.mxu0 0.0
    %118 = vmatprep.subr.mxu0 0.0
    %119 = vmatpush1.msra.mxu0 0.0
    %120 = vmatprep.subr.mxu0 0.0
    %121 = vmatpush1.msra.mxu0 0.0
    %122 = vmatprep.subr.mxu0 0.0
    %123 = vmatpush1.msra.mxu0 0.0
    %124 = vmatprep.subr.mxu0 0.0
    %125 = vmatpush1.msra.mxu0 0.0
    %126 = vmatprep.subr.mxu0 0.0
    %127 = vmatpush1.msra.mxu0 0.0
    %128 = vmatprep.subr.mxu0 0.0
    %129 = vmatpush1.msra.mxu0 0.0
    %130 = vmatprep.subr.mxu0 0.0
    %131 = vmatpush1.msra.mxu0 0.0
    %132 = vmatprep.subr.mxu0 0.0
    %133 = vmatpush1.msra.mxu0 0.0
    %134 = vmatprep.subr.mxu0 0.0
    %135 = vmatpush1.msra.mxu0 0.0
    %136 = vmatprep.subr.mxu0 0.0
    %137 = vmatpush1.msra.mxu0 0.0
    %138 = vmatprep.subr.mxu0 0.0
    %139 = vmatpush1.msra.mxu0 0.0
    %140 = vmatprep.mubr.f32.mxu0 0.0
    %141 = vmatmul.mubr.f32.gmra.mrb[0].mxu0 %v54
    %v142 = vpop.f32.mrb[0].mxu0
    %v143 = vadd.f32 %v75, %v142
    %v144 = vpop.f32.mrb[0].mxu0
    %145 = vdwg.mxu0
    %v146 = vmul.f32 %v143, 0.01
    %v147 = vmax.f32 %v143, %v146
    %s148 = scalar_lea.vmem [#allocation5], 128
    %v149 = vld [vmem:[%s148] sm:$0xff]
    %v150 = vld [vmem:[%s148 + $0x8] sm:$0xff]
    %v151 = vld [vmem:[%s148 + $0x10] sm:$0xff]
    %v152 = vld [vmem:[%s148 + $0x18] sm:$0xff]
    %v153 = vld [vmem:[%s148 + $0x20] sm:$0xff]
    %v154 = vld [vmem:[%s148 + $0x28] sm:$0xff]
    %v155 = vld [vmem:[%s148 + $0x30] sm:$0xff]
    %v156 = vld [vmem:[%s148 + $0x38] sm:$0xff]
    %v157 = vld [vmem:[%s148 + $0x40] sm:$0xff]
    %v158 = vld [vmem:[%s148 + $0x48] sm:$0xff]
    %v159 = vld [vmem:[%s148 + $0x50] sm:$0xff]
    %v160 = vld [vmem:[%s148 + $0x58] sm:$0xff]
    %v161 = vld [vmem:[%s148 + $0x60] sm:$0xff]
    %v162 = vld [vmem:[%s148 + $0x68] sm:$0xff]
    %v163 = vld [vmem:[%s148 + $0x70] sm:$0xff]
    %v164 = vld [vmem:[%s148 + $0x78] sm:$0xff]
    %v165 = vld [vmem:[#allocation7 + $0x1] sm:$0x1]
    %v166 = vlaneseq
    %v167 = vshrl.u32 %v166, 7
    %v168 = vsub.s32 0, %v167
    %v169 = vrot.slane %v165, %v168
    %170 = vmatprep.subr.mxu0 0.0
    %171 = vmatpush1.msra.mxu0 %v149
    %172 = vmatprep.subr.mxu0 0.0
    %173 = vmatpush1.msra.mxu0 %v150
    %174 = vmatprep.subr.mxu0 0.0
    %175 = vmatpush1.msra.mxu0 %v151
    %176 = vmatprep.subr.mxu0 0.0
    %177 = vmatpush1.msra.mxu0 %v152
    %178 = vmatprep.subr.mxu0 0.0
    %179 = vmatpush1.msra.mxu0 %v153
    %180 = vmatprep.subr.mxu0 0.0
    %181 = vmatpush1.msra.mxu0 %v154
    %182 = vmatprep.subr.mxu0 0.0
    %183 = vmatpush1.msra.mxu0 %v155
    %184 = vmatprep.subr.mxu0 0.0
    %185 = vmatpush1.msra.mxu0 %v156
    %186 = vmatprep.subr.mxu0 0.0
    %187 = vmatpush1.msra.mxu0 %v157
    %188 = vmatprep.subr.mxu0 0.0
    %189 = vmatpush1.msra.mxu0 %v158
    %190 = vmatprep.subr.mxu0 0.0
    %191 = vmatpush1.msra.mxu0 %v159
    %192 = vmatprep.subr.mxu0 0.0
    %193 = vmatpush1.msra.mxu0 %v160
    %194 = vmatprep.subr.mxu0 0.0
    %195 = vmatpush1.msra.mxu0 %v161
    %196 = vmatprep.subr.mxu0 0.0
    %197 = vmatpush1.msra.mxu0 %v162
    %198 = vmatprep.subr.mxu0 0.0
    %199 = vmatpush1.msra.mxu0 %v163
    %200 = vmatprep.subr.mxu0 0.0
    %201 = vmatpush1.msra.mxu0 %v164
    %202 = vmatprep.subr.mxu0 0.0
    %203 = vmatpush1.msra.mxu0 0.0
    %204 = vmatprep.subr.mxu0 0.0
    %205 = vmatpush1.msra.mxu0 0.0
    %206 = vmatprep.subr.mxu0 0.0
    %207 = vmatpush1.msra.mxu0 0.0
    %208 = vmatprep.subr.mxu0 0.0
    %209 = vmatpush1.msra.mxu0 0.0
    %210 = vmatprep.subr.mxu0 0.0
    %211 = vmatpush1.msra.mxu0 0.0
    %212 = vmatprep.subr.mxu0 0.0
    %213 = vmatpush1.msra.mxu0 0.0
    %214 = vmatprep.subr.mxu0 0.0
    %215 = vmatpush1.msra.mxu0 0.0
    %216 = vmatprep.subr.mxu0 0.0
    %217 = vmatpush1.msra.mxu0 0.0
    %218 = vmatprep.subr.mxu0 0.0
    %219 = vmatpush1.msra.mxu0 0.0
    %220 = vmatprep.subr.mxu0 0.0
    %221 = vmatpush1.msra.mxu0 0.0
    %222 = vmatprep.subr.mxu0 0.0
    %223 = vmatpush1.msra.mxu0 0.0
    %224 = vmatprep.subr.mxu0 0.0
    %225 = vmatpush1.msra.mxu0 0.0
    %226 = vmatprep.subr.mxu0 0.0
    %227 = vmatpush1.msra.mxu0 0.0
    %228 = vmatprep.subr.mxu0 0.0
    %229 = vmatpush1.msra.mxu0 0.0
    %230 = vmatprep.subr.mxu0 0.0
    %231 = vmatpush1.msra.mxu0 0.0
    %232 = vmatprep.subr.mxu0 0.0
    %233 = vmatpush1.msra.mxu0 0.0
    %234 = vmatprep.mubr.f32.mxu0 0.0
    %235 = vmatmul.mubr.f32.gmra.mrb[0].mxu0 %v147
    %v236 = vpop.f32.mrb[0].mxu0
    %v237 = vadd.f32 %v169, %v236
    %v238 = vpop.f32.mrb[0].mxu0
    %239 = vdwg.mxu0
    %v240 = vmul.f32 %v237, 0.01
    %v241 = vmax.f32 %v237, %v240
    %s242 = scalar_lea.vmem [#allocation5], 256
    %v243 = vld [vmem:[%s242] sm:$0xff]
    %v244 = vld [vmem:[%s242 + $0x8] sm:$0xff]
    %v245 = vld [vmem:[%s242 + $0x10] sm:$0xff]
    %v246 = vld [vmem:[%s242 + $0x18] sm:$0xff]
    %v247 = vld [vmem:[%s242 + $0x20] sm:$0xff]
    %v248 = vld [vmem:[%s242 + $0x28] sm:$0xff]
    %v249 = vld [vmem:[%s242 + $0x30] sm:$0xff]
    %v250 = vld [vmem:[%s242 + $0x38] sm:$0xff]
    %v251 = vld [vmem:[%s242 + $0x40] sm:$0xff]
    %v252 = vld [vmem:[%s242 + $0x48] sm:$0xff]
    %v253 = vld [vmem:[%s242 + $0x50] sm:$0xff]
    %v254 = vld [vmem:[%s242 + $0x58] sm:$0xff]
    %v255 = vld [vmem:[%s242 + $0x60] sm:$0xff]
    %v256 = vld [vmem:[%s242 + $0x68] sm:$0xff]
    %v257 = vld [vmem:[%s242 + $0x70] sm:$0xff]
    %v258 = vld [vmem:[%s242 + $0x78] sm:$0xff]
    %v259 = vld [vmem:[#allocation7 + $0x2] sm:$0x1]
    %v260 = vlaneseq
    %v261 = vshrl.u32 %v260, 7
    %v262 = vsub.s32 0, %v261
    %v263 = vrot.slane %v259, %v262
    %264 = vmatprep.subr.mxu0 0.0
    %265 = vmatpush1.msra.mxu0 %v243
    %266 = vmatprep.subr.mxu0 0.0
    %267 = vmatpush1.msra.mxu0 %v244
    %268 = vmatprep.subr.mxu0 0.0
    %269 = vmatpush1.msra.mxu0 %v245
    %270 = vmatprep.subr.mxu0 0.0
    %271 = vmatpush1.msra.mxu0 %v246
    %272 = vmatprep.subr.mxu0 0.0
    %273 = vmatpush1.msra.mxu0 %v247
    %274 = vmatprep.subr.mxu0 0.0
    %275 = vmatpush1.msra.mxu0 %v248
    %276 = vmatprep.subr.mxu0 0.0
    %277 = vmatpush1.msra.mxu0 %v249
    %278 = vmatprep.subr.mxu0 0.0
    %279 = vmatpush1.msra.mxu0 %v250
    %280 = vmatprep.subr.mxu0 0.0
    %281 = vmatpush1.msra.mxu0 %v251
    %282 = vmatprep.subr.mxu0 0.0
    %283 = vmatpush1.msra.mxu0 %v252
    %284 = vmatprep.subr.mxu0 0.0
    %285 = vmatpush1.msra.mxu0 %v253
    %286 = vmatprep.subr.mxu0 0.0
    %287 = vmatpush1.msra.mxu0 %v254
    %288 = vmatprep.subr.mxu0 0.0
    %289 = vmatpush1.msra.mxu0 %v255
    %290 = vmatprep.subr.mxu0 0.0
    %291 = vmatpush1.msra.mxu0 %v256
    %292 = vmatprep.subr.mxu0 0.0
    %293 = vmatpush1.msra.mxu0 %v257
    %294 = vmatprep.subr.mxu0 0.0
    %295 = vmatpush1.msra.mxu0 %v258
    %296 = vmatprep.subr.mxu0 0.0
    %297 = vmatpush1.msra.mxu0 0.0
    %298 = vmatprep.subr.mxu0 0.0
    %299 = vmatpush1.msra.mxu0 0.0
    %300 = vmatprep.subr.mxu0 0.0
    %301 = vmatpush1.msra.mxu0 0.0
    %302 = vmatprep.subr.mxu0 0.0
    %303 = vmatpush1.msra.mxu0 0.0
    %304 = vmatprep.subr.mxu0 0.0
    %305 = vmatpush1.msra.mxu0 0.0
    %306 = vmatprep.subr.mxu0 0.0
    %307 = vmatpush1.msra.mxu0 0.0
    %308 = vmatprep.subr.mxu0 0.0
    %309 = vmatpush1.msra.mxu0 0.0
    %310 = vmatprep.subr.mxu0 0.0
    %311 = vmatpush1.msra.mxu0 0.0
    %312 = vmatprep.subr.mxu0 0.0
    %313 = vmatpush1.msra.mxu0 0.0
    %314 = vmatprep.subr.mxu0 0.0
    %315 = vmatpush1.msra.mxu0 0.0
    %316 = vmatprep.subr.mxu0 0.0
    %317 = vmatpush1.msra.mxu0 0.0
    %318 = vmatprep.subr.mxu0 0.0
    %319 = vmatpush1.msra.mxu0 0.0
    %320 = vmatprep.subr.mxu0 0.0
    %321 = vmatpush1.msra.mxu0 0.0
    %322 = vmatprep.subr.mxu0 0.0
    %323 = vmatpush1.msra.mxu0 0.0
    %324 = vmatprep.subr.mxu0 0.0
    %325 = vmatpush1.msra.mxu0 0.0
    %326 = vmatprep.subr.mxu0 0.0
    %327 = vmatpush1.msra.mxu0 0.0
    %328 = vmatprep.mubr.f32.mxu0 0.0
    %329 = vmatmul.mubr.f32.gmra.mrb[0].mxu0 %v241
    %v330 = vpop.f32.mrb[0].mxu0
    %v331 = vadd.f32 %v263, %v330
    %v332 = vpop.f32.mrb[0].mxu0
    %333 = vdwg.mxu0
    %v334 = vmul.f32 %v331, 0.01
    %v335 = vmax.f32 %v331, %v334
    %s336 = scalar_lea.vmem [#allocation5], 384
    %v337 = vld [vmem:[%s336] sm:$0xff]
    %v338 = vld [vmem:[%s336 + $0x8] sm:$0xff]
    %v339 = vld [vmem:[%s336 + $0x10] sm:$0xff]
    %v340 = vld [vmem:[%s336 + $0x18] sm:$0xff]
    %v341 = vld [vmem:[%s336 + $0x20] sm:$0xff]
    %v342 = vld [vmem:[%s336 + $0x28] sm:$0xff]
    %v343 = vld [vmem:[%s336 + $0x30] sm:$0xff]
    %v344 = vld [vmem:[%s336 + $0x38] sm:$0xff]
    %v345 = vld [vmem:[%s336 + $0x40] sm:$0xff]
    %v346 = vld [vmem:[%s336 + $0x48] sm:$0xff]
    %v347 = vld [vmem:[%s336 + $0x50] sm:$0xff]
    %v348 = vld [vmem:[%s336 + $0x58] sm:$0xff]
    %v349 = vld [vmem:[%s336 + $0x60] sm:$0xff]
    %v350 = vld [vmem:[%s336 + $0x68] sm:$0xff]
    %v351 = vld [vmem:[%s336 + $0x70] sm:$0xff]
    %v352 = vld [vmem:[%s336 + $0x78] sm:$0xff]
    %v353 = vld [vmem:[#allocation7 + $0x3] sm:$0x1]
    %v354 = vlaneseq
    %v355 = vshrl.u32 %v354, 7
    %v356 = vsub.s32 0, %v355
    %v357 = vrot.slane %v353, %v356
    %358 = vmatprep.subr.mxu0 0.0
    %359 = vmatpush1.msra.mxu0 %v337
    %360 = vmatprep.subr.mxu0 0.0
    %361 = vmatpush1.msra.mxu0 %v338
    %362 = vmatprep.subr.mxu0 0.0
    %363 = vmatpush1.msra.mxu0 %v339
    %364 = vmatprep.subr.mxu0 0.0
    %365 = vmatpush1.msra.mxu0 %v340
    %366 = vmatprep.subr.mxu0 0.0
    %367 = vmatpush1.msra.mxu0 %v341
    %368 = vmatprep.subr.mxu0 0.0
    %369 = vmatpush1.msra.mxu0 %v342
    %370 = vmatprep.subr.mxu0 0.0
    %371 = vmatpush1.msra.mxu0 %v343
    %372 = vmatprep.subr.mxu0 0.0
    %373 = vmatpush1.msra.mxu0 %v344
    %374 = vmatprep.subr.mxu0 0.0
    %375 = vmatpush1.msra.mxu0 %v345
    %376 = vmatprep.subr.mxu0 0.0
    %377 = vmatpush1.msra.mxu0 %v346
    %378 = vmatprep.subr.mxu0 0.0
    %379 = vmatpush1.msra.mxu0 %v347
    %380 = vmatprep.subr.mxu0 0.0
    %381 = vmatpush1.msra.mxu0 %v348
    %382 = vmatprep.subr.mxu0 0.0
    %383 = vmatpush1.msra.mxu0 %v349
    %384 = vmatprep.subr.mxu0 0.0
    %385 = vmatpush1.msra.mxu0 %v350
    %386 = vmatprep.subr.mxu0 0.0
    %387 = vmatpush1.msra.mxu0 %v351
    %388 = vmatprep.subr.mxu0 0.0
    %389 = vmatpush1.msra.mxu0 %v352
    %390 = vmatprep.subr.mxu0 0.0
    %391 = vmatpush1.msra.mxu0 0.0
    %392 = vmatprep.subr.mxu0 0.0
    %393 = vmatpush1.msra.mxu0 0.0
    %394 = vmatprep.subr.mxu0 0.0
    %395 = vmatpush1.msra.mxu0 0.0
    %396 = vmatprep.subr.mxu0 0.0
    %397 = vmatpush1.msra.mxu0 0.0
    %398 = vmatprep.subr.mxu0 0.0
    %399 = vmatpush1.msra.mxu0 0.0
    %400 = vmatprep.subr.mxu0 0.0
    %401 = vmatpush1.msra.mxu0 0.0
    %402 = vmatprep.subr.mxu0 0.0
    %403 = vmatpush1.msra.mxu0 0.0
    %404 = vmatprep.subr.mxu0 0.0
    %405 = vmatpush1.msra.mxu0 0.0
    %406 = vmatprep.subr.mxu0 0.0
    %407 = vmatpush1.msra.mxu0 0.0
    %408 = vmatprep.subr.mxu0 0.0
    %409 = vmatpush1.msra.mxu0 0.0
    %410 = vmatprep.subr.mxu0 0.0
    %411 = vmatpush1.msra.mxu0 0.0
    %412 = vmatprep.subr.mxu0 0.0
    %413 = vmatpush1.msra.mxu0 0.0
    %414 = vmatprep.subr.mxu0 0.0
    %415 = vmatpush1.msra.mxu0 0.0
    %416 = vmatprep.subr.mxu0 0.0
    %417 = vmatpush1.msra.mxu0 0.0
    %418 = vmatprep.subr.mxu0 0.0
    %419 = vmatpush1.msra.mxu0 0.0
    %420 = vmatprep.subr.mxu0 0.0
    %421 = vmatpush1.msra.mxu0 0.0
    %422 = vmatprep.mubr.f32.mxu0 0.0
    %423 = vmatmul.mubr.f32.gmra.mrb[0].mxu0 %v335
    %v424 = vpop.f32.mrb[0].mxu0
    %v425 = vadd.f32 %v357, %v424
    %v426 = vpop.f32.mrb[0].mxu0
    %427 = vdwg.mxu0
    %v428 = vtanh.pop %v425
    %429 = vst [vmem:[#allocation8] sm:$0xff] %v428
    // Predicated region
    $region26: #{tpu_custom_call.1} parent=1 // pred_check
      _
    $region27: #{tpu_custom_call.1} parent=1 // pred_check_branch
      %431 = sbr.rel (0) target = $region29
    $region28: #{tpu_custom_call.1} parent=1 // pred_region
      %s433 = ssub.s32 128, 128
      %434 = vsyncadd [#allocation4], %s433
      %s436 = sshll.u32 [#allocation8], 4
      %s437 = int_to_ptr.vmem [resolvable:$true] %s436
      %439 = dma.vmem_to_hbm [thread:$0]  %s437, 128, %s3, [#allocation4]
    $region29: #{tpu_custom_call.1} parent=1 // pred_fallthru
      _
    // Predicated region
    $region30: #{tpu_custom_call.1} parent=1 // pred_check
      _
    $region31: #{tpu_custom_call.1} parent=1 // pred_check_branch
      %441 = sbr.rel (0) target = $region33
    $region32: #{tpu_custom_call.1} parent=1 // pred_region
      %442 = dma.done [#allocation4], 128
    $region33: #{tpu_custom_call.1} parent=1 // pred_fallthru
      _
    %443 = vsyncpa [#allocation3], 1
    %444 = vsyncpa [#allocation6], 1
    %445 = vsyncpa [#allocation4], 1

</llo_original>
